<compile_context>
chip_gen: v6e
topology: v6e:2x2x1
jax: 0.10.0
libtpu: 0.0.40
codegen_flags: <defaults>
</compile_context>

<pallas_src>
import jax
import jax.numpy as jnp
from jax import lax
from jax.experimental import pallas as pl
from jax.experimental.pallas import tpu as pltpu


def fused_mm_affine_kernel(x1_ref, x2t_ref, x3_ref, x4t_ref, w_ref, b_ref, o_ref):
    # Contract the lane-dense last dims: (1,K) . (N,K) -> (1,N), f32 accumulate.
    dn = (((1,), (1,)), ((), ()))
    acc = lax.dot_general(x1_ref[...], x2t_ref[...], dn,
                          preferred_element_type=jnp.float32)
    acc = acc + lax.dot_general(x3_ref[...], x4t_ref[...], dn,
                                preferred_element_type=jnp.float32)
    # fc1 as the scalar affine it denotes: w * v3 + b.
    o_ref[...] = acc * w_ref[0] + b_ref[0]


@jax.jit
def model_forward(x1, x2, x3, x4, fc1_w, fc1_b):
    """fc1_w, fc1_b: shape-(1,) f32 parameters of Linear(1,1)."""
    M, K = x1.shape
    _, N = x2.shape

    # Lane-dense RHS layout: K becomes the last (lane) dim of the RHS tiles.
    # Under jit these tiny transposes are in-program copies, not extra dispatches.
    x2t = x2.T  # (N, K)
    x4t = x4.T  # (N, K)

    vmem = pl.BlockSpec(memory_space=pltpu.MemorySpace.VMEM)
    smem = pl.BlockSpec(memory_space=pltpu.MemorySpace.SMEM)

    bytes_accessed = 4 * (x1.size + x2.size + x3.size + x4.size + 2 + M * N)
    cost = pl.CostEstimate(flops=2 * M * (2 * K) * N + 2 * M * N,
                           transcendentals=0,
                           bytes_accessed=bytes_accessed)

    return pl.pallas_call(
        fused_mm_affine_kernel,
        out_shape=jax.ShapeDtypeStruct((M, N), jnp.float32),
        in_specs=[vmem, vmem, vmem, vmem, smem, smem],
        out_specs=vmem,
        cost_estimate=cost,
    )(x1, x2t, x3, x4t, fc1_w, fc1_b)


def reference_forward(x1, x2, x3, x4, fc1_w, fc1_b):
    v3 = x1 @ x2 + x3 @ x4
    return v3 * fc1_w[0] + fc1_b[0]


if __name__ == "__main__":
    key = jax.random.PRNGKey(0)
    k1, k2, k3, k4, kw, kb = jax.random.split(key, 6)

    # Shapes implied by the module's forward.
    x1 = jax.random.normal(k1, (1, 65), dtype=jnp.float32)
    x2 = jax.random.normal(k2, (65, 5), dtype=jnp.float32)
    x3 = jax.random.normal(k3, (1, 65), dtype=jnp.float32)
    x4 = jax.random.normal(k4, (65, 5), dtype=jnp.float32)

    # Deterministic fc1 parameters (Linear(1,1): 1 weight, 1 bias).
    fc1_w = jax.random.uniform(kw, (1,), jnp.float32, minval=-1.0, maxval=1.0)
    fc1_b = jax.random.uniform(kb, (1,), jnp.float32, minval=-1.0, maxval=1.0)

    out = model_forward(x1, x2, x3, x4, fc1_w, fc1_b)
    jax.block_until_ready(out)

    ref = reference_forward(x1, x2, x3, x4, fc1_w, fc1_b)
    assert out.shape == (1, 5)
    assert jnp.allclose(out, ref, atol=1e-4, rtol=1e-4), (out, ref)

    print("KERNEL_OK")
</pallas_src>

<mosaic_0001>
module attributes {stable_mosaic.version = 11 : i64} {
  func.func @fused_mm_affine_kernel(%arg0: memref<1x65xf32, #tpu.memory_space<vmem>>, %arg1: memref<5x65xf32, #tpu.memory_space<vmem>>, %arg2: memref<1x65xf32, #tpu.memory_space<vmem>>, %arg3: memref<5x65xf32, #tpu.memory_space<vmem>>, %arg4: memref<1xf32, #tpu.memory_space<smem>>, %arg5: memref<1xf32, #tpu.memory_space<smem>>, %arg6: memref<1x5xf32, #tpu.memory_space<vmem>>) attributes {dimension_semantics = [], scalar_prefetch = 0 : i64, scratch_operands = 0 : i64, tpu.core_type = #tpu.core_type<tc>} {
    %c0 = arith.constant 0 : index
    %c0_0 = arith.constant 0 : index
    %0 = vector.load %arg0[%c0, %c0_0] : memref<1x65xf32, #tpu.memory_space<vmem>>, vector<1x65xf32>
    %c0_1 = arith.constant 0 : index
    %c0_2 = arith.constant 0 : index
    %1 = vector.load %arg1[%c0_1, %c0_2] : memref<5x65xf32, #tpu.memory_space<vmem>>, vector<5x65xf32>
    %cst = arith.constant dense<0.000000e+00> : vector<1x5xf32>
    %2 = tpu.matmul %0, %1, %cst {dimension_numbers = #tpu.dot_dimension_numbers<[1], [1], [0], [0], [0, 0, 1, 0], [], []>} : vector<1x65xf32>, vector<5x65xf32>, vector<1x5xf32> -> vector<1x5xf32>
    %c0_3 = arith.constant 0 : index
    %c0_4 = arith.constant 0 : index
    %3 = vector.load %arg2[%c0_3, %c0_4] : memref<1x65xf32, #tpu.memory_space<vmem>>, vector<1x65xf32>
    %c0_5 = arith.constant 0 : index
    %c0_6 = arith.constant 0 : index
    %4 = vector.load %arg3[%c0_5, %c0_6] : memref<5x65xf32, #tpu.memory_space<vmem>>, vector<5x65xf32>
    %cst_7 = arith.constant dense<0.000000e+00> : vector<1x5xf32>
    %5 = tpu.matmul %3, %4, %cst_7 {dimension_numbers = #tpu.dot_dimension_numbers<[1], [1], [0], [0], [0, 0, 1, 0], [], []>} : vector<1x65xf32>, vector<5x65xf32>, vector<1x5xf32> -> vector<1x5xf32>
    %6 = arith.addf %2, %5 : vector<1x5xf32>
    %c0_8 = arith.constant 0 : index
    %7 = memref.load %arg4[%c0_8] : memref<1xf32, #tpu.memory_space<smem>>
    %8 = vector.broadcast %7 : f32 to vector<1x5xf32>
    %9 = arith.mulf %6, %8 : vector<1x5xf32>
    %c0_9 = arith.constant 0 : index
    %10 = memref.load %arg5[%c0_9] : memref<1xf32, #tpu.memory_space<smem>>
    %11 = vector.broadcast %10 : f32 to vector<1x5xf32>
    %12 = arith.addf %9, %11 : vector<1x5xf32>
    %c0_10 = arith.constant 0 : index
    %c0_11 = arith.constant 0 : index
    %13 = vector.load %arg6[%c0_10, %c0_11] : memref<1x5xf32, #tpu.memory_space<vmem>>, vector<1x5xf32>
    tpu.vector_store %arg6[%c0_10, %c0_11], %12 {strides = array<i32>} : memref<1x5xf32, #tpu.memory_space<vmem>>, vector<1x5xf32>,
    return
  }
}

</mosaic_0001>

<llo_original>
// kernel: model_forward.1
$region0: #{model_forward.1}
  #allocation0 [shape = 'u32[]', space=smem, size = 0x4, offset = 0x4, fixed_abs, tag = 'smem constant byte address 0x4 - core index']
  #allocation1 [shape = 'u32[144,128]{1,0:T(1,128)}', space=vmem, size = 0x12000, scoped, tag = 'internal scratch']
  #allocation2 [shape = 'f32[1]{0:T(128)S(6)}', space=smem, size = 0x200, scoped, tag = 'scoped memory for model_forward.1']
  #allocation3 [shape = 'f32[1]{0:T(128)S(6)}', space=smem, size = 0x200, scoped, tag = 'scoped memory for model_forward.1']
  %s0 = inlined_call_operand.vmem [shape: f32[1,65], index: 0, kind: input, shape index: {}]
  %s1 = inlined_call_operand.vmem [shape: f32[5,65], index: 1, kind: input, shape index: {}]
  %s2 = inlined_call_operand.vmem [shape: f32[1,65], index: 2, kind: input, shape index: {}]
  %s3 = inlined_call_operand.hbm [shape: f32[5,65], index: 3, kind: input, shape index: {}]
  %s4 = inlined_call_operand.<no memory space> [shape: f32[1], index: 4, kind: input, shape index: {}]
  %s5 = inlined_call_operand.<no memory space> [shape: f32[1], index: 5, kind: input, shape index: {}]
  %s6 = inlined_call_operand.hbm [shape: f32[1,5], index: 6, kind: output, shape index: {}]
  %s7 = sld [smem:[#allocation0]]
  $region38: #{model_forward.1} parent=0
    _
  %s9 = ssub.s32 1, %s7
  %s10 = scalar_select 0, %s9, %s7
  %11 = sst [smem:[#allocation2]] %s4
  %12 = sst [smem:[#allocation3]] %s5
  $region1: #{model_forward.1} parent=0
    #allocation4 [shape = 'u8[4096]{0}', space=vmem, size = 0x1000, scoped, tag = 'input window, operand 3, single buffered']
    #allocation5 [shape = 's32[1]{0}', space=sflag, size = 0x4, scoped, tag = 'scoped memory for model_forward.1']
    #allocation6 [shape = 's32[1]{0}', space=sflag, size = 0x4, scoped, tag = 'scoped memory for model_forward.1']
    #allocation7 [shape = 'u8[512]{0}', space=vmem, size = 0x400, scoped, tag = 'output window, operand 0, single buffered']
    %13 = vsyncpa [#allocation5], 0
    %14 = vsyncpa [#allocation6], 0
    // Predicated region
    $region2: #{model_forward.1} parent=1 // pred_check
      _
    $region3: #{model_forward.1} parent=1 // pred_check_branch
      %16 = sbr.rel (0) target = $region5
    $region4: #{model_forward.1} parent=1 // pred_region
      _
    $region5: #{model_forward.1} parent=1 // pred_fallthru
      _
    // Predicated region
    $region6: #{model_forward.1} parent=1 // pred_check
      _
    $region7: #{model_forward.1} parent=1 // pred_check_branch
      %18 = sbr.rel (0) target = $region9
    $region8: #{model_forward.1} parent=1 // pred_region
      _
    $region9: #{model_forward.1} parent=1 // pred_fallthru
      _
    // Predicated region
    $region10: #{model_forward.1} parent=1 // pred_check
      _
    $region11: #{model_forward.1} parent=1 // pred_check_branch
      %20 = sbr.rel (0) target = $region13
    $region12: #{model_forward.1} parent=1 // pred_region
      _
    $region13: #{model_forward.1} parent=1 // pred_fallthru
      _
    // Predicated region
    $region14: #{model_forward.1} parent=1 // pred_check
      _
    $region15: #{model_forward.1} parent=1 // pred_check_branch
      %22 = sbr.rel (0) target = $region17
    $region16: #{model_forward.1} parent=1 // pred_region
      %s24 = ssub.s32 128, 128
      %25 = vsyncadd [#allocation5], %s24
      %s27 = sshll.u32 [#allocation4], 4
      %s28 = int_to_ptr.vmem [resolvable:$true] %s27
      %30 = dma.hbm_to_vmem [thread:$0]  %s3, 128, %s28, [#allocation5]
    $region17: #{model_forward.1} parent=1 // pred_fallthru
      _
    // Predicated region
    $region18: #{model_forward.1} parent=1 // pred_check
      _
    $region19: #{model_forward.1} parent=1 // pred_check_branch
      %32 = sbr.rel (0) target = $region21
    $region20: #{model_forward.1} parent=1 // pred_region
      _
    $region21: #{model_forward.1} parent=1 // pred_fallthru
      _
    // Predicated region
    $region22: #{model_forward.1} parent=1 // pred_check
      _
    $region23: #{model_forward.1} parent=1 // pred_check_branch
      %34 = sbr.rel (0) target = $region25
    $region24: #{model_forward.1} parent=1 // pred_region
      _
    $region25: #{model_forward.1} parent=1 // pred_fallthru
      _
    // Predicated region
    $region26: #{model_forward.1} parent=1 // pred_check
      _
    $region27: #{model_forward.1} parent=1 // pred_check_branch
      %36 = sbr.rel (0) target = $region29
    $region28: #{model_forward.1} parent=1 // pred_region
      %37 = dma.done [#allocation5], 128
    $region29: #{model_forward.1} parent=1 // pred_fallthru
      _
    %v38 = vld [vmem:[%s0] sm:$0x1]
    %v39 = vld [vmem:[%s1] sm:$0x1f]
    %v40 = vld [vmem:[%s2] sm:$0x1]
    %v41 = vld [vmem:[#allocation4] sm:$0x1f]
    %vm42 = vcmask 531456
    %v44 = vsel %vm42, %v40, 0
    %v47 = vsel %vm42, %v41, 0
    %49 = vmatprep.subr.mxu0 0.0
    %50 = vmatpush1.xpose.msra.mxu0 0.0
    %51 = vmatprep.subr.mxu0 0.0
    %52 = vmatpush1.xpose.msra.mxu0 0.0
    %53 = vmatprep.subr.mxu0 0.0
    %54 = vmatpush1.xpose.msra.mxu0 0.0
    %55 = vmatprep.subr.mxu0 0.0
    %56 = vmatpush1.xpose.msra.mxu0 0.0
    %57 = vmatprep.subr.mxu0 0.0
    %58 = vmatpush1.xpose.msra.mxu0 0.0
    %59 = vmatprep.subr.mxu0 0.0
    %60 = vmatpush1.xpose.msra.mxu0 0.0
    %61 = vmatprep.subr.mxu0 0.0
    %62 = vmatpush1.xpose.msra.mxu0 0.0
    %63 = vmatprep.subr.mxu0 0.0
    %64 = vmatpush1.xpose.msra.mxu0 0.0
    %65 = vmatprep.subr.mxu0 0.0
    %66 = vmatpush1.xpose.msra.mxu0 0.0
    %67 = vmatprep.subr.mxu0 0.0
    %68 = vmatpush1.xpose.msra.mxu0 0.0
    %69 = vmatprep.subr.mxu0 0.0
    %70 = vmatpush1.xpose.msra.mxu0 0.0
    %71 = vmatprep.subr.mxu0 0.0
    %72 = vmatpush1.xpose.msra.mxu0 0.0
    %73 = vmatprep.subr.mxu0 0.0
    %74 = vmatpush1.xpose.msra.mxu0 0.0
    %75 = vmatprep.subr.mxu0 0.0
    %76 = vmatpush1.xpose.msra.mxu0 0.0
    %77 = vmatprep.subr.mxu0 0.0
    %78 = vmatpush1.xpose.msra.mxu0 0.0
    %79 = vmatprep.subr.mxu0 0.0
    %80 = vmatpush1.xpose.msra.mxu0 %v47
    %81 = vmatprep.subr.mxu0 0.0
    %82 = vmatpush2.xpose.msra.mxu0 0.0
    %83 = vmatprep.subr.mxu0 0.0
    %84 = vmatpush2.xpose.msra.mxu0 0.0
    %85 = vmatprep.subr.mxu0 0.0
    %86 = vmatpush2.xpose.msra.mxu0 0.0
    %87 = vmatprep.subr.mxu0 0.0
    %88 = vmatpush2.xpose.msra.mxu0 0.0
    %89 = vmatprep.subr.mxu0 0.0
    %90 = vmatpush2.xpose.msra.mxu0 0.0
    %91 = vmatprep.subr.mxu0 0.0
    %92 = vmatpush2.xpose.msra.mxu0 0.0
    %93 = vmatprep.subr.mxu0 0.0
    %94 = vmatpush2.xpose.msra.mxu0 0.0
    %95 = vmatprep.subr.mxu0 0.0
    %96 = vmatpush2.xpose.msra.mxu0 0.0
    %97 = vmatprep.subr.mxu0 0.0
    %98 = vmatpush2.xpose.msra.mxu0 0.0
    %99 = vmatprep.subr.mxu0 0.0
    %100 = vmatpush2.xpose.msra.mxu0 0.0
    %101 = vmatprep.subr.mxu0 0.0
    %102 = vmatpush2.xpose.msra.mxu0 0.0
    %103 = vmatprep.subr.mxu0 0.0
    %104 = vmatpush2.xpose.msra.mxu0 0.0
    %105 = vmatprep.subr.mxu0 0.0
    %106 = vmatpush2.xpose.msra.mxu0 0.0
    %107 = vmatprep.subr.mxu0 0.0
    %108 = vmatpush2.xpose.msra.mxu0 0.0
    %109 = vmatprep.subr.mxu0 0.0
    %110 = vmatpush2.xpose.msra.mxu0 0.0
    %111 = vmatprep.subr.mxu0 0.0
    %112 = vmatpush2.xpose.msra.mxu0 0.0
    %113 = vmatprep.mubr.f32.mxu0 0.0
    %114 = vmatmul.mubr.f32.gmra.mxu0 %v44
    %v115 = vpop.f32.mrf.mxu0
    %v116 = vadd.f32 0.0, %v115
    %v117 = vpop.f32.mrf.mxu0
    %118 = vdwg.mxu0
    %v120 = vsel %vm42, %v38, 0
    %v123 = vsel %vm42, %v39, 0
    %125 = vmatprep.subr.mxu0 0.0
    %126 = vmatpush1.xpose.msra.mxu0 0.0
    %127 = vmatprep.subr.mxu0 0.0
    %128 = vmatpush1.xpose.msra.mxu0 0.0
    %129 = vmatprep.subr.mxu0 0.0
    %130 = vmatpush1.xpose.msra.mxu0 0.0
    %131 = vmatprep.subr.mxu0 0.0
    %132 = vmatpush1.xpose.msra.mxu0 0.0
    %133 = vmatprep.subr.mxu0 0.0
    %134 = vmatpush1.xpose.msra.mxu0 0.0
    %135 = vmatprep.subr.mxu0 0.0
    %136 = vmatpush1.xpose.msra.mxu0 0.0
    %137 = vmatprep.subr.mxu0 0.0
    %138 = vmatpush1.xpose.msra.mxu0 0.0
    %139 = vmatprep.subr.mxu0 0.0
    %140 = vmatpush1.xpose.msra.mxu0 0.0
    %141 = vmatprep.subr.mxu0 0.0
    %142 = vmatpush1.xpose.msra.mxu0 0.0
    %143 = vmatprep.subr.mxu0 0.0
    %144 = vmatpush1.xpose.msra.mxu0 0.0
    %145 = vmatprep.subr.mxu0 0.0
    %146 = vmatpush1.xpose.msra.mxu0 0.0
    %147 = vmatprep.subr.mxu0 0.0
    %148 = vmatpush1.xpose.msra.mxu0 0.0
    %149 = vmatprep.subr.mxu0 0.0
    %150 = vmatpush1.xpose.msra.mxu0 0.0
    %151 = vmatprep.subr.mxu0 0.0
    %152 = vmatpush1.xpose.msra.mxu0 0.0
    %153 = vmatprep.subr.mxu0 0.0
    %154 = vmatpush1.xpose.msra.mxu0 0.0
    %155 = vmatprep.subr.mxu0 0.0
    %156 = vmatpush1.xpose.msra.mxu0 %v123
    %157 = vmatprep.subr.mxu0 0.0
    %158 = vmatpush2.xpose.msra.mxu0 0.0
    %159 = vmatprep.subr.mxu0 0.0
    %160 = vmatpush2.xpose.msra.mxu0 0.0
    %161 = vmatprep.subr.mxu0 0.0
    %162 = vmatpush2.xpose.msra.mxu0 0.0
    %163 = vmatprep.subr.mxu0 0.0
    %164 = vmatpush2.xpose.msra.mxu0 0.0
    %165 = vmatprep.subr.mxu0 0.0
    %166 = vmatpush2.xpose.msra.mxu0 0.0
    %167 = vmatprep.subr.mxu0 0.0
    %168 = vmatpush2.xpose.msra.mxu0 0.0
    %169 = vmatprep.subr.mxu0 0.0
    %170 = vmatpush2.xpose.msra.mxu0 0.0
    %171 = vmatprep.subr.mxu0 0.0
    %172 = vmatpush2.xpose.msra.mxu0 0.0
    %173 = vmatprep.subr.mxu0 0.0
    %174 = vmatpush2.xpose.msra.mxu0 0.0
    %175 = vmatprep.subr.mxu0 0.0
    %176 = vmatpush2.xpose.msra.mxu0 0.0
    %177 = vmatprep.subr.mxu0 0.0
    %178 = vmatpush2.xpose.msra.mxu0 0.0
    %179 = vmatprep.subr.mxu0 0.0
    %180 = vmatpush2.xpose.msra.mxu0 0.0
    %181 = vmatprep.subr.mxu0 0.0
    %182 = vmatpush2.xpose.msra.mxu0 0.0
    %183 = vmatprep.subr.mxu0 0.0
    %184 = vmatpush2.xpose.msra.mxu0 0.0
    %185 = vmatprep.subr.mxu0 0.0
    %186 = vmatpush2.xpose.msra.mxu0 0.0
    %187 = vmatprep.subr.mxu0 0.0
    %188 = vmatpush2.xpose.msra.mxu0 0.0
    %189 = vmatprep.mubr.f32.mxu0 0.0
    %190 = vmatmul.mubr.f32.gmra.mxu0 %v120
    %v191 = vpop.f32.mrf.mxu0
    %v192 = vadd.f32 %v116, %v191
    %v193 = vpop.f32.mrf.mxu0
    %194 = vdwg.mxu0
    %s195 = sld [smem:[#allocation2]]
    %v196 = vstv %s195
    %v197 = vmul.f32 %v192, %v196
    %s198 = sld [smem:[#allocation3]]
    %v199 = vstv %s198
    %v200 = vadd.f32 %v197, %v199
    %vm201 = vcmask 32768
    %202 = vst.msk [vmem:[#allocation7] sm:$0x1] %vm201, %v200
    // Predicated region
    $region30: #{model_forward.1} parent=1 // pred_check
      _
    $region31: #{model_forward.1} parent=1 // pred_check_branch
      %204 = sbr.rel (0) target = $region33
    $region32: #{model_forward.1} parent=1 // pred_region
      %s206 = ssub.s32 16, 16
      %207 = vsyncadd [#allocation6], %s206
      %s209 = sshll.u32 [#allocation7], 4
      %s210 = int_to_ptr.vmem [resolvable:$true] %s209
      %212 = dma.vmem_to_hbm [thread:$0]  %s210, 16, %s6, [#allocation6]
    $region33: #{model_forward.1} parent=1 // pred_fallthru
      _
    // Predicated region
    $region34: #{model_forward.1} parent=1 // pred_check
      _
    $region35: #{model_forward.1} parent=1 // pred_check_branch
      %214 = sbr.rel (0) target = $region37
    $region36: #{model_forward.1} parent=1 // pred_region
      %215 = dma.done [#allocation6], 16
    $region37: #{model_forward.1} parent=1 // pred_fallthru
      _
    %216 = vsyncpa [#allocation5], 1
    %217 = vsyncpa [#allocation6], 1

</llo_original>
